<compile_context>
chip_gen: v5e
topology: v5e:2x2
jax: 0.10.0
libtpu: 0.0.40
codegen_flags: <defaults>
</compile_context>

<pallas_src>
import jax
import jax.numpy as jnp
import numpy as np
from jax.experimental import pallas as pl
from jax.experimental.pallas import tpu as pltpu


def _smoothness_kernel(d_ref, r_ref, out_ref, txb, tyb):
    # d_ref: (1, Cd, TH, W) native dtype   r_ref: (1, Cr, TH, W) native dtype
    # out_ref: (1, 1, 8, 128) f32
    # txb/tyb: VMEM (TH+2, W) f32; rows [0:2) hold the previous tile's last two
    #          tx/ty rows (the H-stencil carry), rows [2:TH+2) this tile's rows.
    Cd = d_ref.shape[1]
    Cr = r_ref.shape[1]
    TH, W = d_ref.shape[2], d_ref.shape[3]
    t = pl.program_id(1)
    num_t = pl.num_programs(1)

    # Reset the carry at the first tile of every batch element (tx/ty of the
    # zero-padded rows -1, -2 are exactly zero).
    @pl.when(t == 0)
    def _():
        txb[pl.ds(0, 2), :] = jnp.zeros((2, W), jnp.float32)
        tyb[pl.ds(0, 2), :] = jnp.zeros((2, W), jnp.float32)

    # Channel sums (accumulate in f32 regardless of input dtype) and difference.
    ds = d_ref[0, 0].astype(jnp.float32)
    for c in range(1, Cd):
        ds = ds + d_ref[0, c].astype(jnp.float32)
    rs = r_ref[0, 0].astype(jnp.float32)
    for c in range(1, Cr):
        rs = rs + r_ref[0, c].astype(jnp.float32)
    x = ds - rs                                          # (TH, W) f32

    # W-direction (lane) taps with zero padding; masks from one (1, W) iota.
    lane = jax.lax.broadcasted_iota(jnp.int32, (1, W), 1)
    zero = jnp.float32(0.0)
    xl = jnp.where(lane >= 1, pltpu.roll(x, shift=1, axis=1), zero)        # x[i, j-1]
    xr = jnp.where(lane <= W - 2, pltpu.roll(x, shift=(W - 1) % W, axis=1), zero)  # x[i, j+1]
    tx = xl - xr                                         # [1, 0, -1] along W
    ty = xl + 2.0 * x + xr                               # [1, 2, 1] along W

    # Stage this tile's rows after the 2-row carry, then apply the H stencil.
    txb[pl.ds(2, TH), :] = tx
    tyb[pl.ds(2, TH), :] = ty

    # Buffer row k holds tx/ty of global row (t*TH - 2 + k); output block row i
    # corresponds to global output row (t*TH - 1 + i).
    gx = txb[pl.ds(0, TH), :] + 2.0 * txb[pl.ds(1, TH), :] + txb[pl.ds(2, TH), :]
    gy = tyb[pl.ds(0, TH), :] - tyb[pl.ds(2, TH), :]

    # Final image row H-1 (only emitted by the last tile): tx[H] = ty[H] = 0.
    gx_last = txb[pl.ds(TH, 1), :] + 2.0 * txb[pl.ds(TH + 1, 1), :]
    gy_last = tyb[pl.ds(TH, 1), :]

    rest = jnp.sum(jnp.abs(gx[1:, :])) + jnp.sum(jnp.abs(gy[1:, :]))
    row0 = jnp.sum(jnp.abs(gx[:1, :])) + jnp.sum(jnp.abs(gy[:1, :]))   # global row t*TH-1
    last = jnp.sum(jnp.abs(gx_last)) + jnp.sum(jnp.abs(gy_last))

    w0 = (t > 0).astype(jnp.float32)            # row -1 does not exist at t == 0
    wl = (t == num_t - 1).astype(jnp.float32)   # row H-1 only on the last tile
    partial = rest + w0 * row0 + wl * last

    # Carry the last two tx/ty rows forward for the next tile.
    txb[pl.ds(0, 2), :] = txb[pl.ds(TH, 2), :]
    tyb[pl.ds(0, 2), :] = tyb[pl.ds(TH, 2), :]

    # Lane-dense unmasked store of the per-(batch, tile) partial.
    out_ref[...] = jnp.broadcast_to(partial, out_ref.shape)


def _pick_row_tile(H, mult, target=256):
    """Largest row tile <= target that is a multiple of `mult` and divides H."""
    if H <= target:
        return H
    th = (target // mult) * mult
    while th >= mult:
        if H % th == 0:
            return th
        th -= mult
    return H  # no suitable divisor: fall back to whole-image rows


def smoothness_loss(depth_map, rgb_image, *, row_tile=None):
    assert depth_map.ndim == 4
    assert rgb_image.ndim == 4
    assert depth_map.shape[1] in (1, 3)
    assert rgb_image.shape[1] in (1, 3)
    B, Cd, H, W = depth_map.shape
    Br, Cr, Hr, Wr = rgb_image.shape
    assert (B, H, W) == (Br, Hr, Wr)
    assert H >= 2, "smoothness_loss kernel requires H >= 2"

    # No wrapper upcast: DMA native dtype, accumulate in f32 inside the kernel.
    d_bytes = jnp.dtype(depth_map.dtype).itemsize
    r_bytes = jnp.dtype(rgb_image.dtype).itemsize
    mult = max(8, 32 // min(d_bytes, r_bytes))   # sublane packing of the narrower dtype

    if row_tile is None:
        TH = _pick_row_tile(H, mult)
    else:
        TH = row_tile
        assert H % TH == 0 and (TH == H or TH % mult == 0)
    T = H // TH

    in_bytes = B * H * W * (Cd * d_bytes + Cr * r_bytes)
    out_bytes = B * T * 8 * 128 * 4
    cost = pl.CostEstimate(flops=25 * B * H * W, transcendentals=0,
                           bytes_accessed=in_bytes + out_bytes)

    partials = pl.pallas_call(
        _smoothness_kernel,
        out_shape=jax.ShapeDtypeStruct((B, T, 8, 128), jnp.float32),
        grid_spec=pltpu.PrefetchScalarGridSpec(
            num_scalar_prefetch=0,
            grid=(B, T),
            in_specs=[
                pl.BlockSpec((1, Cd, TH, W), lambda b, t: (b, 0, t, 0)),
                pl.BlockSpec((1, Cr, TH, W), lambda b, t: (b, 0, t, 0)),
            ],
            out_specs=pl.BlockSpec((1, 1, 8, 128), lambda b, t: (b, t, 0, 0)),
            scratch_shapes=[
                pltpu.VMEM((TH + 2, W), jnp.float32),   # tx carry/staging
                pltpu.VMEM((TH + 2, W), jnp.float32),   # ty carry/staging
            ],
        ),
        compiler_params=pltpu.CompilerParams(
            dimension_semantics=("parallel", "arbitrary"),
            vmem_limit_bytes=64 * 1024 * 1024,
        ),
        cost_estimate=cost,
    )(depth_map, rgb_image)

    inv = jnp.float32(1.0 / float(B * H * W))   # static reciprocal, no divide
    return jnp.sum(partials[:, :, 0, 0]) * inv


def _ref_loss(depth_map, rgb_image):
    # Pure-JAX reference mirroring the PyTorch code exactly (NCHW conv2d).
    sobel_x = jnp.array([[1, 0, -1], [2, 0, -2], [1, 0, -1]], jnp.float32)
    sobel_y = jnp.array([[1, 2, 1], [0, 0, 0], [-1, -2, -1]], jnp.float32)

    def conv(x, k):
        c = x.shape[1]
        w = jnp.tile(k[None, None], (1, c, 1, 1))
        return jax.lax.conv_general_dilated(
            x, w, window_strides=(1, 1), padding=((1, 1), (1, 1)),
            dimension_numbers=("NCHW", "OIHW", "NCHW"))

    dgx, dgy = conv(depth_map, sobel_x), conv(depth_map, sobel_y)
    rgx, rgy = conv(rgb_image, sobel_x), conv(rgb_image, sobel_y)
    return jnp.mean(jnp.abs(dgx - rgx)) + jnp.mean(jnp.abs(dgy - rgy))


if __name__ == "__main__":
    key = jax.random.PRNGKey(0)
    k1, k2 = jax.random.split(key)
    depth = jax.random.normal(k1, (2, 1, 16, 16), dtype=jnp.float32)
    rgb = jax.random.normal(k2, (2, 3, 16, 16), dtype=jnp.float32)

    ref = _ref_loss(depth, rgb)

    # Single-tile path (TH == H).
    out1 = jax.block_until_ready(smoothness_loss(depth, rgb))
    assert np.allclose(np.asarray(out1), np.asarray(ref), rtol=1e-4, atol=1e-5), (
        float(out1), float(ref))

    # Multi-tile path: exercises the 2-row carry across H tiles.
    out2 = jax.block_until_ready(smoothness_loss(depth, rgb, row_tile=8))
    assert np.allclose(np.asarray(out2), np.asarray(ref), rtol=1e-4, atol=1e-5), (
        float(out2), float(ref))

    # Native bf16 DMA path (f32 accumulation inside the kernel).
    d16, r16 = depth.astype(jnp.bfloat16), rgb.astype(jnp.bfloat16)
    ref16 = _ref_loss(d16.astype(jnp.float32), r16.astype(jnp.float32))
    out3 = jax.block_until_ready(smoothness_loss(d16, r16))
    assert np.allclose(np.asarray(out3), np.asarray(ref16), rtol=1e-3, atol=1e-4), (
        float(out3), float(ref16))

    print("KERNEL_OK")
</pallas_src>

<mosaic_0001>
module attributes {stable_mosaic.version = 11 : i64} {
  func.func @_smoothness_kernel(%arg0: i32, %arg1: i32, %arg2: memref<1x1x16x16xf32, #tpu.memory_space<vmem>>, %arg3: memref<1x3x16x16xf32, #tpu.memory_space<vmem>>, %arg4: memref<1x1x8x128xf32, #tpu.memory_space<vmem>>, %arg5: memref<18x16xf32, #tpu.memory_space<vmem>>, %arg6: memref<18x16xf32, #tpu.memory_space<vmem>>) attributes {dimension_semantics = [#tpu.dimension_semantics<parallel>, #tpu.dimension_semantics<arbitrary>], iteration_bounds = array<i64: 2, 1>, scalar_prefetch = 0 : i64, scratch_operands = 2 : i64, tpu.core_type = #tpu.core_type<tc>, window_params = [{transform_indices = @transform_0, window_bounds = array<i64: 1, 1, 16, 16>}, {transform_indices = @transform_1, window_bounds = array<i64: 1, 3, 16, 16>}, {transform_indices = @transform_2, window_bounds = array<i64: 1, 1, 8, 128>}]} {
    %c0_i32 = arith.constant 0 : i32
    %0 = arith.cmpi eq, %arg1, %c0_i32 : i32
    %1 = arith.extui %0 : i1 to i32
    %c0_i32_0 = arith.constant 0 : i32
    %2 = arith.cmpi ne, %1, %c0_i32_0 : i32
    scf.if %2 {
      %cst_57 = arith.constant 0.000000e+00 : f32
      %105 = vector.broadcast %cst_57 : f32 to vector<2x16xf32>
      %c0_58 = arith.constant 0 : index
      %c0_59 = arith.constant 0 : index
      %106 = vector.load %arg5[%c0_58, %c0_59] : memref<18x16xf32, #tpu.memory_space<vmem>>, vector<2x16xf32>
      tpu.vector_store %arg5[%c0_58, %c0_59], %105 {strides = array<i32>} : memref<18x16xf32, #tpu.memory_space<vmem>>, vector<2x16xf32>,
      %cst_60 = arith.constant 0.000000e+00 : f32
      %107 = vector.broadcast %cst_60 : f32 to vector<2x16xf32>
      %c0_61 = arith.constant 0 : index
      %c0_62 = arith.constant 0 : index
      %108 = vector.load %arg6[%c0_61, %c0_62] : memref<18x16xf32, #tpu.memory_space<vmem>>, vector<2x16xf32>
      tpu.vector_store %arg6[%c0_61, %c0_62], %107 {strides = array<i32>} : memref<18x16xf32, #tpu.memory_space<vmem>>, vector<2x16xf32>,
    } else {
    }
    %c0 = arith.constant 0 : index
    %c0_1 = arith.constant 0 : index
    %c0_2 = arith.constant 0 : index
    %c0_3 = arith.constant 0 : index
    %3 = vector.load %arg2[%c0, %c0_1, %c0_2, %c0_3] : memref<1x1x16x16xf32, #tpu.memory_space<vmem>>, vector<1x1x16x16xf32>
    %4 = vector.shape_cast %3 : vector<1x1x16x16xf32> to vector<16x16xf32>
    %c0_4 = arith.constant 0 : index
    %c0_5 = arith.constant 0 : index
    %c0_6 = arith.constant 0 : index
    %c0_7 = arith.constant 0 : index
    %5 = vector.load %arg3[%c0_4, %c0_5, %c0_6, %c0_7] : memref<1x3x16x16xf32, #tpu.memory_space<vmem>>, vector<1x1x16x16xf32>
    %6 = vector.shape_cast %5 : vector<1x1x16x16xf32> to vector<16x16xf32>
    %c0_8 = arith.constant 0 : index
    %c1 = arith.constant 1 : index
    %c0_9 = arith.constant 0 : index
    %c0_10 = arith.constant 0 : index
    %7 = vector.load %arg3[%c0_8, %c1, %c0_9, %c0_10] : memref<1x3x16x16xf32, #tpu.memory_space<vmem>>, vector<1x1x16x16xf32>
    %8 = vector.shape_cast %7 : vector<1x1x16x16xf32> to vector<16x16xf32>
    %9 = arith.addf %6, %8 : vector<16x16xf32>
    %c0_11 = arith.constant 0 : index
    %c2 = arith.constant 2 : index
    %c0_12 = arith.constant 0 : index
    %c0_13 = arith.constant 0 : index
    %10 = vector.load %arg3[%c0_11, %c2, %c0_12, %c0_13] : memref<1x3x16x16xf32, #tpu.memory_space<vmem>>, vector<1x1x16x16xf32>
    %11 = vector.shape_cast %10 : vector<1x1x16x16xf32> to vector<16x16xf32>
    %12 = arith.addf %9, %11 : vector<16x16xf32>
    %13 = arith.subf %4, %12 : vector<16x16xf32>
    %14 = tpu.iota {dimensions = array<i32: 1>} : vector<1x16xi32>
    %c1_i32 = arith.constant 1 : i32
    %15 = vector.broadcast %c1_i32 : i32 to vector<1x16xi32>
    %16 = arith.cmpi sge, %14, %15 : vector<1x16xi32>
    %c1_i32_14 = arith.constant 1 : i32
    %17 = tpu.dynamic_rotate %13 by %c1_i32_14 dim 1 : vector<16x16xf32>, i32 -> vector<16x16xf32>
    %cst = arith.constant 0.000000e+00 : f32
    %18 = vector.shape_cast %16 : vector<1x16xi1> to vector<1x16xi1>
    %19 = vector.broadcast %18 : vector<1x16xi1> to vector<16x16xi1>
    %20 = vector.broadcast %cst : f32 to vector<16x16xf32>
    %21 = arith.select %19, %17, %20 : vector<16x16xi1>, vector<16x16xf32>
    %c14_i32 = arith.constant 14 : i32
    %22 = vector.broadcast %c14_i32 : i32 to vector<1x16xi32>
    %23 = arith.cmpi sle, %14, %22 : vector<1x16xi32>
    %c15_i32 = arith.constant 15 : i32
    %24 = tpu.dynamic_rotate %13 by %c15_i32 dim 1 : vector<16x16xf32>, i32 -> vector<16x16xf32>
    %cst_15 = arith.constant 0.000000e+00 : f32
    %25 = vector.shape_cast %23 : vector<1x16xi1> to vector<1x16xi1>
    %26 = vector.broadcast %25 : vector<1x16xi1> to vector<16x16xi1>
    %27 = vector.broadcast %cst_15 : f32 to vector<16x16xf32>
    %28 = arith.select %26, %24, %27 : vector<16x16xi1>, vector<16x16xf32>
    %29 = arith.subf %21, %28 : vector<16x16xf32>
    %cst_16 = arith.constant 2.000000e+00 : f32
    %30 = vector.broadcast %cst_16 : f32 to vector<16x16xf32>
    %31 = arith.mulf %30, %13 : vector<16x16xf32>
    %32 = arith.addf %21, %31 : vector<16x16xf32>
    %33 = arith.addf %32, %28 : vector<16x16xf32>
    %c2_17 = arith.constant 2 : index
    %c0_18 = arith.constant 0 : index
    %34 = vector.load %arg5[%c2_17, %c0_18] : memref<18x16xf32, #tpu.memory_space<vmem>>, vector<16x16xf32>
    tpu.vector_store %arg5[%c2_17, %c0_18], %29 {strides = array<i32>} : memref<18x16xf32, #tpu.memory_space<vmem>>, vector<16x16xf32>,
    %c2_19 = arith.constant 2 : index
    %c0_20 = arith.constant 0 : index
    %35 = vector.load %arg6[%c2_19, %c0_20] : memref<18x16xf32, #tpu.memory_space<vmem>>, vector<16x16xf32>
    tpu.vector_store %arg6[%c2_19, %c0_20], %33 {strides = array<i32>} : memref<18x16xf32, #tpu.memory_space<vmem>>, vector<16x16xf32>,
    %c0_21 = arith.constant 0 : index
    %c0_22 = arith.constant 0 : index
    %36 = vector.load %arg5[%c0_21, %c0_22] : memref<18x16xf32, #tpu.memory_space<vmem>>, vector<16x16xf32>
    %c1_23 = arith.constant 1 : index
    %c0_24 = arith.constant 0 : index
    %37 = vector.load %arg5[%c1_23, %c0_24] : memref<18x16xf32, #tpu.memory_space<vmem>>, vector<16x16xf32>
    %cst_25 = arith.constant 2.000000e+00 : f32
    %38 = vector.broadcast %cst_25 : f32 to vector<16x16xf32>
    %39 = arith.mulf %38, %37 : vector<16x16xf32>
    %40 = arith.addf %36, %39 : vector<16x16xf32>
    %c2_26 = arith.constant 2 : index
    %c0_27 = arith.constant 0 : index
    %41 = vector.load %arg5[%c2_26, %c0_27] : memref<18x16xf32, #tpu.memory_space<vmem>>, vector<16x16xf32>
    %42 = arith.addf %40, %41 : vector<16x16xf32>
    %c0_28 = arith.constant 0 : index
    %c0_29 = arith.constant 0 : index
    %43 = vector.load %arg6[%c0_28, %c0_29] : memref<18x16xf32, #tpu.memory_space<vmem>>, vector<16x16xf32>
    %c2_30 = arith.constant 2 : index
    %c0_31 = arith.constant 0 : index
    %44 = vector.load %arg6[%c2_30, %c0_31] : memref<18x16xf32, #tpu.memory_space<vmem>>, vector<16x16xf32>
    %45 = arith.subf %43, %44 : vector<16x16xf32>
    %c16 = arith.constant 16 : index
    %c0_32 = arith.constant 0 : index
    %46 = vector.load %arg5[%c16, %c0_32] : memref<18x16xf32, #tpu.memory_space<vmem>>, vector<1x16xf32>
    %c17 = arith.constant 17 : index
    %c0_33 = arith.constant 0 : index
    %47 = vector.load %arg5[%c17, %c0_33] : memref<18x16xf32, #tpu.memory_space<vmem>>, vector<1x16xf32>
    %cst_34 = arith.constant 2.000000e+00 : f32
    %48 = vector.broadcast %cst_34 : f32 to vector<1x16xf32>
    %49 = arith.mulf %48, %47 : vector<1x16xf32>
    %50 = arith.addf %46, %49 : vector<1x16xf32>
    %c16_35 = arith.constant 16 : index
    %c0_36 = arith.constant 0 : index
    %51 = vector.load %arg6[%c16_35, %c0_36] : memref<18x16xf32, #tpu.memory_space<vmem>>, vector<1x16xf32>
    %52 = vector.extract_strided_slice %42 {offsets = [1, 0], sizes = [15, 16], strides = [1, 1]} : vector<16x16xf32> to vector<15x16xf32>
    %53 = math.absf %52 : vector<15x16xf32>
    %54 = vector.shape_cast %53 : vector<15x16xf32> to vector<1x15x16xf32>
    %cst_37 = arith.constant dense<0.000000e+00> : vector<1xf32>
    %55 = vector.multi_reduction <add>, %54, %cst_37 [1, 2] : vector<1x15x16xf32> to vector<1xf32>
    %56 = vector.shape_cast %55 : vector<1xf32> to vector<1x1x1xf32>
    %57 = vector.extract %56[0, 0, 0] : f32 from vector<1x1x1xf32>
    %58 = vector.extract_strided_slice %45 {offsets = [1, 0], sizes = [15, 16], strides = [1, 1]} : vector<16x16xf32> to vector<15x16xf32>
    %59 = math.absf %58 : vector<15x16xf32>
    %60 = vector.shape_cast %59 : vector<15x16xf32> to vector<1x15x16xf32>
    %cst_38 = arith.constant dense<0.000000e+00> : vector<1xf32>
    %61 = vector.multi_reduction <add>, %60, %cst_38 [1, 2] : vector<1x15x16xf32> to vector<1xf32>
    %62 = vector.shape_cast %61 : vector<1xf32> to vector<1x1x1xf32>
    %63 = vector.extract %62[0, 0, 0] : f32 from vector<1x1x1xf32>
    %64 = arith.addf %57, %63 : f32
    %65 = vector.extract_strided_slice %42 {offsets = [0, 0], sizes = [1, 16], strides = [1, 1]} : vector<16x16xf32> to vector<1x16xf32>
    %66 = math.absf %65 : vector<1x16xf32>
    %67 = vector.shape_cast %66 : vector<1x16xf32> to vector<1x1x16xf32>
    %cst_39 = arith.constant dense<0.000000e+00> : vector<1xf32>
    %68 = vector.multi_reduction <add>, %67, %cst_39 [1, 2] : vector<1x1x16xf32> to vector<1xf32>
    %69 = vector.shape_cast %68 : vector<1xf32> to vector<1x1x1xf32>
    %70 = vector.extract %69[0, 0, 0] : f32 from vector<1x1x1xf32>
    %71 = vector.extract_strided_slice %45 {offsets = [0, 0], sizes = [1, 16], strides = [1, 1]} : vector<16x16xf32> to vector<1x16xf32>
    %72 = math.absf %71 : vector<1x16xf32>
    %73 = vector.shape_cast %72 : vector<1x16xf32> to vector<1x1x16xf32>
    %cst_40 = arith.constant dense<0.000000e+00> : vector<1xf32>
    %74 = vector.multi_reduction <add>, %73, %cst_40 [1, 2] : vector<1x1x16xf32> to vector<1xf32>
    %75 = vector.shape_cast %74 : vector<1xf32> to vector<1x1x1xf32>
    %76 = vector.extract %75[0, 0, 0] : f32 from vector<1x1x1xf32>
    %77 = arith.addf %70, %76 : f32
    %78 = math.absf %50 : vector<1x16xf32>
    %79 = vector.shape_cast %78 : vector<1x16xf32> to vector<1x1x16xf32>
    %cst_41 = arith.constant dense<0.000000e+00> : vector<1xf32>
    %80 = vector.multi_reduction <add>, %79, %cst_41 [1, 2] : vector<1x1x16xf32> to vector<1xf32>
    %81 = vector.shape_cast %80 : vector<1xf32> to vector<1x1x1xf32>
    %82 = vector.extract %81[0, 0, 0] : f32 from vector<1x1x1xf32>
    %83 = math.absf %51 : vector<1x16xf32>
    %84 = vector.shape_cast %83 : vector<1x16xf32> to vector<1x1x16xf32>
    %cst_42 = arith.constant dense<0.000000e+00> : vector<1xf32>
    %85 = vector.multi_reduction <add>, %84, %cst_42 [1, 2] : vector<1x1x16xf32> to vector<1xf32>
    %86 = vector.shape_cast %85 : vector<1xf32> to vector<1x1x1xf32>
    %87 = vector.extract %86[0, 0, 0] : f32 from vector<1x1x1xf32>
    %88 = arith.addf %82, %87 : f32
    %c0_i32_43 = arith.constant 0 : i32
    %89 = arith.cmpi sgt, %arg1, %c0_i32_43 : i32
    %90 = arith.extui %89 : i1 to i32
    %91 = arith.sitofp %90 : i32 to f32
    %c0_i32_44 = arith.constant 0 : i32
    %92 = arith.cmpi eq, %arg1, %c0_i32_44 : i32
    %93 = arith.extui %92 : i1 to i32
    %94 = arith.sitofp %93 : i32 to f32
    %95 = arith.mulf %91, %77 : f32
    %96 = arith.addf %64, %95 : f32
    %97 = arith.mulf %94, %88 : f32
    %98 = arith.addf %96, %97 : f32
    %c16_45 = arith.constant 16 : index
    %c0_46 = arith.constant 0 : index
    %99 = vector.load %arg5[%c16_45, %c0_46] : memref<18x16xf32, #tpu.memory_space<vmem>>, vector<2x16xf32>
    %c0_47 = arith.constant 0 : index
    %c0_48 = arith.constant 0 : index
    %100 = vector.load %arg5[%c0_47, %c0_48] : memref<18x16xf32, #tpu.memory_space<vmem>>, vector<2x16xf32>
    tpu.vector_store %arg5[%c0_47, %c0_48], %99 {strides = array<i32>} : memref<18x16xf32, #tpu.memory_space<vmem>>, vector<2x16xf32>,
    %c16_49 = arith.constant 16 : index
    %c0_50 = arith.constant 0 : index
    %101 = vector.load %arg6[%c16_49, %c0_50] : memref<18x16xf32, #tpu.memory_space<vmem>>, vector<2x16xf32>
    %c0_51 = arith.constant 0 : index
    %c0_52 = arith.constant 0 : index
    %102 = vector.load %arg6[%c0_51, %c0_52] : memref<18x16xf32, #tpu.memory_space<vmem>>, vector<2x16xf32>
    tpu.vector_store %arg6[%c0_51, %c0_52], %101 {strides = array<i32>} : memref<18x16xf32, #tpu.memory_space<vmem>>, vector<2x16xf32>,
    %103 = vector.broadcast %98 : f32 to vector<1x1x8x128xf32>
    %c0_53 = arith.constant 0 : index
    %c0_54 = arith.constant 0 : index
    %c0_55 = arith.constant 0 : index
    %c0_56 = arith.constant 0 : index
    %104 = vector.load %arg4[%c0_53, %c0_54, %c0_55, %c0_56] : memref<1x1x8x128xf32, #tpu.memory_space<vmem>>, vector<1x1x8x128xf32>
    tpu.vector_store %arg4[%c0_53, %c0_54, %c0_55, %c0_56], %103 {strides = array<i32>} : memref<1x1x8x128xf32, #tpu.memory_space<vmem>>, vector<1x1x8x128xf32>,
    return
  }
  func.func @transform_0(%arg0: i32, %arg1: i32) -> (i32, i32, i32, i32) {
    %c0_i32 = arith.constant 0 : i32
    %c0_i32_0 = arith.constant 0 : i32
    %c0_i32_1 = arith.constant 0 : i32
    return %arg0, %c0_i32, %arg1, %c0_i32_0 : i32, i32, i32, i32
  }
  func.func @transform_1(%arg0: i32, %arg1: i32) -> (i32, i32, i32, i32) {
    %c0_i32 = arith.constant 0 : i32
    %c0_i32_0 = arith.constant 0 : i32
    %c0_i32_1 = arith.constant 0 : i32
    return %arg0, %c0_i32, %arg1, %c0_i32_0 : i32, i32, i32, i32
  }
  func.func @transform_2(%arg0: i32, %arg1: i32) -> (i32, i32, i32, i32) {
    %c0_i32 = arith.constant 0 : i32
    %c0_i32_0 = arith.constant 0 : i32
    %c0_i32_1 = arith.constant 0 : i32
    return %arg0, %arg1, %c0_i32, %c0_i32_0 : i32, i32, i32, i32
  }
}

</mosaic_0001>

<llo_original>
// kernel: tpu_custom_call.1
$region0: #{tpu_custom_call.1}
  #allocation0 [shape = 'u32[]', space=smem, size = 0x4, offset = 0x4, fixed_abs, tag = 'smem constant byte address 0x4 - core index']
  #allocation1 [shape = 'u32[72,128]{1,0:T(1,128)}', space=vmem, size = 0x9000, scoped, tag = 'internal scratch']
  #allocation2 [shape = 'f32[18,16]{1,0:T(8,128)}', space=vmem, size = 0x3000, scoped, tag = 'scratch operand']
  #allocation3 [shape = 'f32[18,16]{1,0:T(8,128)}', space=vmem, size = 0x3000, scoped, tag = 'scratch operand']
  %s0 = inlined_call_operand.hbm [shape: f32[2,1,16,16], index: 0, kind: input, shape index: {}]
  %s1 = inlined_call_operand.hbm [shape: f32[2,3,16,16], index: 1, kind: input, shape index: {}]
  %s2 = inlined_call_operand.hbm [shape: f32[2,1,8,128], index: 2, kind: output, shape index: {}]
  %s3 = sld [smem:[#allocation0]]
  $region53: #{tpu_custom_call.1} parent=0
    _
  %s5 = ssub.s32 1, %s3
  %s6 = scalar_select 0, %s5, %s3
  $region1: #{tpu_custom_call.1} parent=0
    #allocation4 [shape = 'u8[16384]{0}', space=vmem, size = 0x4000, scoped, tag = 'input window, operand 0']
    #allocation5 [shape = 's32[2]{0}', space=sflag, size = 0x8, scoped, tag = 'scoped memory for tpu_custom_call.1']
    #allocation6 [shape = 's32[2]{0}', space=sflag, size = 0x8, scoped, tag = 'scoped memory for tpu_custom_call.1']
    #allocation7 [shape = 'u8[49152]{0}', space=vmem, size = 0xc000, scoped, tag = 'input window, operand 1']
    #allocation8 [shape = 's32[2]{0}', space=sflag, size = 0x8, scoped, tag = 'scoped memory for tpu_custom_call.1']
    #allocation9 [shape = 'u8[8192]{0}', space=vmem, size = 0x2000, scoped, tag = 'output window, operand 0']
    %7 = vsyncpa [#allocation5], 0
    %s8 = scalar_lea.sflag [#allocation5], 1
    %9 = vsyncpa %s8, 0
    %10 = vsyncpa [#allocation8], 0
    %s11 = scalar_lea.sflag [#allocation8], 1
    %12 = vsyncpa %s11, 0
    %13 = vsyncpa [#allocation6], 0
    %s14 = scalar_lea.sflag [#allocation6], 1
    %15 = vsyncpa %s14, 0
    loop: start=0, step=1, limit=4
    $region2: #{tpu_custom_call.1} parent=1 // loop_pre_header
      _
    $region3: #{tpu_custom_call.1} parent=1 // loop_header
      %s17 = sphi 0, %s21
      %p18 = scmp.ge.s32.totalorder %s17, 4
      %s24 = sphi 0, %s36
      %s25 = sphi 0, %s32
      %s26 = sphi 0, %s24
      %s27 = sphi 0, %s25
      %s28 = sphi 0, %s26
      %s29 = sphi 0, %s27
      %s41 = sphi 0, %s43
      %s44 = sphi 0, %s41
      %s45 = sphi 0, %s44
      %s61 = sphi 0, %s45
      %s69 = sphi 0, %s71
      %s72 = sphi 0, %s69
      %s73 = sphi 0, %s72
      %s89 = sphi 0, %s73
      %s97 = sphi 0, %s99
      %s100 = sphi 0, %s97
      %s101 = sphi 0, %s100
      %s117 = sphi 0, %s101
    $region4: #{tpu_custom_call.1} parent=1 // loop_header_branch
      %20 = sbr.rel (%p18) target = $region8
    $region5: #{tpu_custom_call.1} parent=1 // loop_body
      %s22 = ssub.s32 %s17, 1
      %s23 = ssub.s32 %s17, 2
      %s30 = sadd.s32 1, %s25
      %p31 = scmp.ge.s32.totalorder %s30, 1
      %s32 = scalar_select %p31, 0, %s30
      %s33 = sadd.s32 1, %s24
      %s34 = scalar_select %p31, %s33, %s24
      %p35 = scmp.ge.s32.totalorder %s34, 2
      %s36 = scalar_select %p35, 0, %s34
      %s37 = ssub.s32 %s24, %s36
      %s38 = ssub.s32 %s25, %s32
      %s39 = sor.u32 %s37, %s38
      %p40 = scmp.eq.s32.totalorder %s39, 0
      %s42 = sadd.s32 %s41, 1
      %s43 = scalar_select %p40, %s41, %s42
      %p46 = pneg %p40
      %p47 = scmp.eq.s32.totalorder %s17, 1
      %p48 = por %p46, %p47
      %p49 = scmp.ne.s32.totalorder %s41, %s44
      %p50 = scmp.eq.s32.totalorder %s17, 0
      %p51 = por %p49, %p50
      %p52 = scmp.ne.s32.totalorder %s41, %s44
      %p53 = scmp.eq.s32.totalorder %s22, 1
      %p54 = por %p52, %p53
      %p55 = scmp.ne.s32.totalorder %s44, %s45
      %p56 = scmp.eq.s32.totalorder %s22, 0
      %p57 = por %p55, %p56
      %p58 = scmp.ne.s32.totalorder %s44, %s45
      %p59 = scmp.eq.s32.totalorder %s23, 1
      %p60 = por %p58, %p59
      %p62 = scmp.ne.s32.totalorder %s45, %s61
      %p63 = scmp.eq.s32.totalorder %s23, 0
      %p64 = por %p62, %p63
      %s65 = ssub.s32 %s24, %s36
      %s66 = ssub.s32 %s25, %s32
      %s67 = sor.u32 %s65, %s66
      %p68 = scmp.eq.s32.totalorder %s67, 0
      %s70 = sadd.s32 %s69, 1
      %s71 = scalar_select %p68, %s69, %s70
      %p74 = pneg %p68
      %p75 = scmp.eq.s32.totalorder %s17, 1
      %p76 = por %p74, %p75
      %p77 = scmp.ne.s32.totalorder %s69, %s72
      %p78 = scmp.eq.s32.totalorder %s17, 0
      %p79 = por %p77, %p78
      %p80 = scmp.ne.s32.totalorder %s69, %s72
      %p81 = scmp.eq.s32.totalorder %s22, 1
      %p82 = por %p80, %p81
      %p83 = scmp.ne.s32.totalorder %s72, %s73
      %p84 = scmp.eq.s32.totalorder %s22, 0
      %p85 = por %p83, %p84
      %p86 = scmp.ne.s32.totalorder %s72, %s73
      %p87 = scmp.eq.s32.totalorder %s23, 1
      %p88 = por %p86, %p87
      %p90 = scmp.ne.s32.totalorder %s73, %s89
      %p91 = scmp.eq.s32.totalorder %s23, 0
      %p92 = por %p90, %p91
      %s93 = ssub.s32 %s24, %s36
      %s94 = ssub.s32 %s25, %s32
      %s95 = sor.u32 %s93, %s94
      %p96 = scmp.eq.s32.totalorder %s95, 0
      %s98 = sadd.s32 %s97, 1
      %s99 = scalar_select %p96, %s97, %s98
      %p102 = pneg %p96
      %p103 = scmp.eq.s32.totalorder %s17, 1
      %p104 = por %p102, %p103
      %p105 = scmp.ne.s32.totalorder %s97, %s100
      %p106 = scmp.eq.s32.totalorder %s17, 0
      %p107 = por %p105, %p106
      %p108 = scmp.ne.s32.totalorder %s97, %s100
      %p109 = scmp.eq.s32.totalorder %s22, 1
      %p110 = por %p108, %p109
      %p111 = scmp.ne.s32.totalorder %s100, %s101
      %p112 = scmp.eq.s32.totalorder %s22, 0
      %p113 = por %p111, %p112
      %p114 = scmp.ne.s32.totalorder %s100, %s101
      %p115 = scmp.eq.s32.totalorder %s23, 1
      %p116 = por %p114, %p115
      %p118 = scmp.ne.s32.totalorder %s101, %s117
      %p119 = scmp.eq.s32.totalorder %s23, 0
      %p120 = por %p118, %p119
      %p121 = scmp.le.s32.totalorder 1, %s17
      %p122 = scmp.lt.s32.totalorder %s17, 3
      %p123 = pnand %p121, %p122
      %p124 = pneg %p123
      // Predicated region
      $region9: #{tpu_custom_call.1} parent=5 // pred_check
        _
      $region10: #{tpu_custom_call.1} parent=5 // pred_check_branch
        %126 = sbr.rel (%p123) target = $region12
      $region11: #{tpu_custom_call.1} parent=5 // pred_region
        %s127 = ssub.s32 %s17, 1
      $region12: #{tpu_custom_call.1} parent=5 // pred_fallthru
        _
      %p128 = scmp.lt.s32.totalorder %s17, 2
      // Predicated region
      $region13: #{tpu_custom_call.1} parent=5 // pred_check
        %p129 = pneg %p128
      $region14: #{tpu_custom_call.1} parent=5 // pred_check_branch
        %131 = sbr.rel (%p129) target = $region16
      $region15: #{tpu_custom_call.1} parent=5 // pred_region
        // Predicated region
        $region17: #{tpu_custom_call.1} parent=15 // pred_check
          %p132 = pneg %p51
        $region18: #{tpu_custom_call.1} parent=15 // pred_check_branch
          %134 = sbr.rel (%p132) target = $region20
        $region19: #{tpu_custom_call.1} parent=15 // pred_region
          %s135 = sand.u32 %s41, 1
          %s136 = scalar_lea.sflag [#allocation5], %s135
          %s137 = sand.u32 %s41, 1
          %s138 = smul.addr %s137, 16
          %s139 = scalar_lea.vmem [#allocation4], %s138
          %s140 = smul.u32 2, %s25
          %142 = vsyncadd %s136, 0
          %s143 = smul.addr %s24, 2
          %s144 = sadd.s32 %s140, %s143
          %s145 = smul.addr %s144, 8
          %s146 = scalar_lea.hbm %s0, %s145
          %s147 = sshll.u32 %s146, 4
          %s148 = int_to_ptr.hbm [resolvable:$true] %s147
          %s149 = sshll.u32 %s139, 4
          %s150 = int_to_ptr.vmem [resolvable:$true] %s149
          %155 = dma.hbm_to_vmem [thread:$0]  %s148, 256, %s150, %s136, 128, 128, 8
        $region20: #{tpu_custom_call.1} parent=15 // pred_fallthru
          _
        // Predicated region
        $region21: #{tpu_custom_call.1} parent=15 // pred_check
          %p156 = pneg %p79
        $region22: #{tpu_custom_call.1} parent=15 // pred_check_branch
          %158 = sbr.rel (%p156) target = $region24
        $region23: #{tpu_custom_call.1} parent=15 // pred_region
          %s159 = sand.u32 %s69, 1
          %s160 = scalar_lea.sflag [#allocation8], %s159
          %s161 = sand.u32 %s69, 1
          %s162 = smul.addr %s161, 48
          %s163 = scalar_lea.vmem [#allocation7], %s162
          %s164 = smul.u32 2, %s25
          %166 = vsyncadd %s160, 0
          %s167 = smul.addr %s24, 6
          %s168 = sadd.s32 %s164, %s167
          %s169 = smul.addr %s168, 8
          %s170 = scalar_lea.hbm %s1, %s169
          %s171 = sshll.u32 %s170, 4
          %s172 = int_to_ptr.hbm [resolvable:$true] %s171
          %s173 = sshll.u32 %s163, 4
          %s174 = int_to_ptr.vmem [resolvable:$true] %s173
          %179 = dma.hbm_to_vmem [thread:$0]  %s172, 768, %s174, %s160, 128, 128, 8
        $region24: #{tpu_custom_call.1} parent=15 // pred_fallthru
          _
      $region16: #{tpu_custom_call.1} parent=5 // pred_fallthru
        _
      %p180 = scmp.le.s32.totalorder 1, %s17
      %p181 = scmp.lt.s32.totalorder %s17, 3
      %p182 = pnand %p180, %p181
      %p183 = pneg %p182
      // Predicated region
      $region25: #{tpu_custom_call.1} parent=5 // pred_check
        _
      $region26: #{tpu_custom_call.1} parent=5 // pred_check_branch
        %185 = sbr.rel (%p182) target = $region28
      $region27: #{tpu_custom_call.1} parent=5 // pred_region
        %s186 = ssub.s32 %s17, 1
        %s187 = sand.u32 %s44, 1
        %s188 = scalar_lea.sflag [#allocation5], %s187
        %s189 = sand.u32 %s44, 1
        %s190 = smul.addr %s189, 16
        %s191 = scalar_lea.vmem [#allocation4], %s190
        // Predicated region
        $region29: #{tpu_custom_call.1} parent=27 // pred_check
          %p192 = pneg %p57
        $region30: #{tpu_custom_call.1} parent=27 // pred_check_branch
          %194 = sbr.rel (%p192) target = $region32
        $region31: #{tpu_custom_call.1} parent=27 // pred_region
          %196 = dma.done %s188, 256
        $region32: #{tpu_custom_call.1} parent=27 // pred_fallthru
          _
        %s197 = sand.u32 %s72, 1
        %s198 = scalar_lea.sflag [#allocation8], %s197
        %s199 = sand.u32 %s72, 1
        %s200 = smul.addr %s199, 48
        %s201 = scalar_lea.vmem [#allocation7], %s200
        // Predicated region
        $region33: #{tpu_custom_call.1} parent=27 // pred_check
          %p202 = pneg %p85
        $region34: #{tpu_custom_call.1} parent=27 // pred_check_branch
          %204 = sbr.rel (%p202) target = $region36
        $region35: #{tpu_custom_call.1} parent=27 // pred_region
          %206 = dma.done %s198, 768
        $region36: #{tpu_custom_call.1} parent=27 // pred_fallthru
          _
        %s207 = sand.u32 %s44, 1
        %s208 = scalar_lea.sflag [#allocation5], %s207
        %s209 = sand.u32 %s44, 1
        %s210 = smul.addr %s209, 16
        %s211 = scalar_lea.vmem [#allocation4], %s210
        %p212 = pneg %p57
        %p213 = pneg %p54
        %s214 = sand.u32 %s72, 1
        %s215 = scalar_lea.sflag [#allocation8], %s214
        %s216 = sand.u32 %s72, 1
        %s217 = smul.addr %s216, 48
        %s218 = scalar_lea.vmem [#allocation7], %s217
        %p219 = pneg %p85
        %p220 = pneg %p82
        %p221 = pneg %p113
        %p222 = pneg %p110
        %s223 = sand.u32 %s100, 1
        %s224 = scalar_lea.sflag [#allocation6], %s223
        %s225 = sand.u32 %s100, 1
        %s226 = smul.addr %s225, 8
        %s227 = scalar_lea.vmem [#allocation9], %s226
        %s228 = smul.u32 2, %s27
        %s229 = smul.u32 2, %s27
        %p230 = scmp.eq.s32.totalorder %s27, 0
        // Predicated region
        $region37: #{tpu_custom_call.1} parent=27 // pred_check
          %p231 = pneg %p230
        $region38: #{tpu_custom_call.1} parent=27 // pred_check_branch
          %233 = sbr.rel (%p231) target = $region40
        $region39: #{tpu_custom_call.1} parent=27 // pred_region
          %vm234 = vcmask 123904
          %235 = vst.msk [vmem:[#allocation2] sm:$0x3] %vm234, 0.0
          %236 = vst.msk [vmem:[#allocation3] sm:$0x3] %vm234, 0.0
        $region40: #{tpu_custom_call.1} parent=27 // pred_fallthru
          _
        %v237 = vld [vmem:[%s191] sm:$0xff]
        %v238 = vld [vmem:[%s191 + $0x8] sm:$0xff]
        %v239 = vld [vmem:[%s201] sm:$0xff]
        %v240 = vld [vmem:[%s201 + $0x8] sm:$0xff]
        %s241 = scalar_lea.vmem %s201, 16 [#allocation7]
        %v242 = vld [vmem:[%s241] sm:$0xff]
        %v243 = vld [vmem:[%s241 + $0x8] sm:$0xff]
        %v244 = vadd.f32 %v239, %v242
        %v245 = vadd.f32 %v240, %v243
        %s246 = scalar_lea.vmem %s201, 32 [#allocation7]
        %v247 = vld [vmem:[%s246] sm:$0xff]
        %v248 = vld [vmem:[%s246 + $0x8] sm:$0xff]
        %v249 = vadd.f32 %v244, %v247
        %v250 = vadd.f32 %v245, %v248
        %v251 = vsub.f32 %v237, %v249
        %v252 = vsub.f32 %v238, %v250
        %v253 = vlaneseq
        %v254 = vand.u32 %v253, 127
        %vm255 = vcmp.ge.s32.totalorder %v254, 1
        %vm256 = vcmask 1047680
        %257 = vrot.lane.b32.xlu0 %v251, 16
        %v258 = vpop.permute.xlu0 %257
        %v259 = vsel %vm256, %v258, %v251
        %260 = vrot.lane.b32.xlu0 %v252, 16
        %v261 = vpop.permute.xlu0 %260
        %v262 = vsel %vm256, %v261, %v252
        %263 = vrot.lane.b32.xlu0 %v259, 16
        %v264 = vpop.permute.xlu0 %263
        %265 = vrot.lane.b32.xlu0 %v262, 16
        %v266 = vpop.permute.xlu0 %265
        %v267 = vsel %vm256, %v264, %v251
        %v268 = vsel %vm256, %v266, %v252
        %v269 = vsel %vm255, 1, 0
        %vm270 = vcmp.eq.s32.totalorder %v269, 1
        %273 = vrot.lane.b32.xlu0 %v267, 113
        %v274 = vpop.permute.xlu0 %273
        %275 = vrot.lane.b32.xlu0 %v268, 113
        %v276 = vpop.permute.xlu0 %275
        %v279 = vsel %vm270, %v274, 0.0
        %v280 = vsel %vm270, %v276, 0.0
        %vm281 = vcmp.le.s32.totalorder %v254, 14
        %v282 = vsel %vm281, 1, 0
        %vm283 = vcmp.eq.s32.totalorder %v282, 1
        %284 = vrot.lane.b32.xlu0 %v267, 127
        %v285 = vpop.permute.xlu0 %284
        %286 = vrot.lane.b32.xlu0 %v268, 127
        %v287 = vpop.permute.xlu0 %286
        %v290 = vsel %vm283, %v285, 0.0
        %v291 = vsel %vm283, %v287, 0.0
        %v292 = vsub.f32 %v279, %v290
        %v293 = vsub.f32 %v280, %v291
        %v294 = vmul.f32 %v251, 2.0
        %v295 = vmul.f32 %v252, 2.0
        %v296 = vadd.f32 %v279, %v294
        %v297 = vadd.f32 %v280, %v295
        %v298 = vadd.f32 %v296, %v290
        %v299 = vadd.f32 %v297, %v291
        %vm300 = vcmask 130048
        %301 = vst.msk [vmem:[#allocation2 + $0x2] sm:$0xff] %vm300, %v292
        %302 = vst.msk [vmem:[#allocation2 + $0xa] sm:$0xff] %vm300, %v293
        %303 = vst.msk [vmem:[#allocation3 + $0x2] sm:$0xff] %vm300, %v298
        %304 = vst.msk [vmem:[#allocation3 + $0xa] sm:$0xff] %vm300, %v299
        %v305 = vld [vmem:[#allocation2] sm:$0xff]
        %v306 = vld [vmem:[#allocation2 + $0x8] sm:$0xff]
        %v307 = vld [vmem:[#allocation2 + $0x1] sm:$0xff]
        %v308 = vld [vmem:[#allocation2 + $0x9] sm:$0xff]
        %v309 = vmul.f32 %v307, 2.0
        %v310 = vmul.f32 %v308, 2.0
        %v311 = vadd.f32 %v305, %v309
        %v312 = vadd.f32 %v306, %v310
        %v313 = vld [vmem:[#allocation2 + $0x2] sm:$0xff]
        %v314 = vld [vmem:[#allocation2 + $0xa] sm:$0xff]
        %v315 = vadd.f32 %v311, %v313
        %v316 = vadd.f32 %v312, %v314
        %v317 = vld [vmem:[#allocation3] sm:$0xff]
        %v318 = vld [vmem:[#allocation3 + $0x8] sm:$0xff]
        %v319 = vld [vmem:[#allocation3 + $0x2] sm:$0xff]
        %v320 = vld [vmem:[#allocation3 + $0xa] sm:$0xff]
        %v321 = vsub.f32 %v317, %v319
        %v322 = vsub.f32 %v318, %v320
        %v323 = vld [vmem:[#allocation2 + $0x10] sm:$0x1]
        %v324 = vld [vmem:[#allocation2 + $0x11] sm:$0x1]
        %v325 = vmul.f32 %v324, 2.0
        %v326 = vadd.f32 %v323, %v325
        %v327 = vld [vmem:[#allocation3 + $0x10] sm:$0x1]
        %v328 = vand.u32 2147483647, %v315
        %v329 = vand.u32 2147483647, %v316
        %vm332 = vcmask 1046528
        %v333 = vrot.slane %v328, 1
        %v334 = vrot.slane %v329, 1
        %v335 = vsel %vm332, %v333, %v334
        %v338 = vsel %vm300, %v335, 0.0
        %vm339 = vcmask 129024
        %v340 = vsel %vm339, %v334, 0.0
        %v341 = vadd.f32 %v338, %v340
        %342 = vadd.xlane.f32.xlu0 %v341
        %v343 = vpop.xlane.xlu0 %342
        %v344 = vrot.slane %v343, 4
        %v345 = vadd.f32 %v343, %v344
        %v346 = vrot.slane %v345, 2
        %v347 = vadd.f32 %v345, %v346
        %v348 = vrot.slane %v347, 1
        %v349 = vadd.f32 %v347, %v348
        %s350 = vtos %v349
        %v351 = vand.u32 2147483647, %v321
        %v352 = vand.u32 2147483647, %v322
        %v355 = vrot.slane %v351, 1
        %v356 = vrot.slane %v352, 1
        %v357 = vsel %vm332, %v355, %v356
        %v360 = vsel %vm300, %v357, 0.0
        %v361 = vsel %vm339, %v356, 0.0
        %v362 = vadd.f32 %v360, %v361
        %363 = vadd.xlane.f32.xlu0 %v362
        %v364 = vpop.xlane.xlu0 %363
        %v365 = vrot.slane %v364, 4
        %v366 = vadd.f32 %v364, %v365
        %v367 = vrot.slane %v366, 2
        %v368 = vadd.f32 %v366, %v367
        %v369 = vrot.slane %v368, 1
        %v370 = vadd.f32 %v368, %v369
        %s371 = vtos %v370
        %s372 = sadd.f32 %s350, %s371
        %vm373 = vcmask 122880
        %v374 = vsel %vm373, %v328, 0.0
        %375 = vadd.xlane.f32.xlu0 %v374
        %v376 = vpop.xlane.xlu0 %375
        %v377 = vrot.slane %v376, 4
        %v378 = vadd.f32 %v376, %v377
        %v379 = vrot.slane %v378, 2
        %v380 = vadd.f32 %v378, %v379
        %v381 = vrot.slane %v380, 1
        %v382 = vadd.f32 %v380, %v381
        %s383 = vtos %v382
        %v384 = vsel %vm373, %v351, 0.0
        %385 = vadd.xlane.f32.xlu0 %v384
        %v386 = vpop.xlane.xlu0 %385
        %v387 = vrot.slane %v386, 4
        %v388 = vadd.f32 %v386, %v387
        %v389 = vrot.slane %v388, 2
        %v390 = vadd.f32 %v388, %v389
        %v391 = vrot.slane %v390, 1
        %v392 = vadd.f32 %v390, %v391
        %s393 = vtos %v392
        %s394 = sadd.f32 %s383, %s393
        %v395 = vand.u32 2147483647, %v326
        %v396 = vsel %vm373, %v395, 0.0
        %397 = vadd.xlane.f32.xlu0 %v396
        %v398 = vpop.xlane.xlu0 %397
        %v399 = vrot.slane %v398, 4
        %v400 = vadd.f32 %v398, %v399
        %v401 = vrot.slane %v400, 2
        %v402 = vadd.f32 %v400, %v401
        %v403 = vrot.slane %v402, 1
        %v404 = vadd.f32 %v402, %v403
        %s405 = vtos %v404
        %v406 = vand.u32 2147483647, %v327
        %v407 = vsel %vm373, %v406, 0.0
        %408 = vadd.xlane.f32.xlu0 %v407
        %v409 = vpop.xlane.xlu0 %408
        %v410 = vrot.slane %v409, 4
        %v411 = vadd.f32 %v409, %v410
        %v412 = vrot.slane %v411, 2
        %v413 = vadd.f32 %v411, %v412
        %v414 = vrot.slane %v413, 1
        %v415 = vadd.f32 %v413, %v414
        %s416 = vtos %v415
        %s417 = sadd.f32 %s405, %s416
        %p418 = scmp.gt.s32.totalorder %s27, 0
        %s419 = scalar_select %p418, 1, 0
        %s420 = scvt.s32.f32 %s419
        %s421 = scalar_select %p230, 1, 0
        %s422 = scvt.s32.f32 %s421
        %s423 = smul.f32 %s420, %s394
        %s424 = sadd.f32 %s372, %s423
        %s425 = smul.f32 %s422, %s417
        %s426 = sadd.f32 %s424, %s425
        %v427 = vld [vmem:[#allocation2 + $0x10] sm:$0x3]
        %vm428 = vcmask 123904
        %429 = vst.msk [vmem:[#allocation2] sm:$0x3] %vm428, %v427
        %v430 = vld [vmem:[#allocation3 + $0x10] sm:$0x3]
        %431 = vst.msk [vmem:[#allocation3] sm:$0x3] %vm428, %v430
        %v432 = vstv %s426
        %433 = vst [vmem:[%s227] sm:$0xff] %v432
        %s434 = sand.u32 %s100, 1
        %s435 = scalar_lea.sflag [#allocation6], %s434
        %s436 = sand.u32 %s100, 1
        %s437 = smul.addr %s436, 8
        %s438 = scalar_lea.vmem [#allocation9], %s437
        // Predicated region
        $region41: #{tpu_custom_call.1} parent=27 // pred_check
          %p439 = pneg %p110
        $region42: #{tpu_custom_call.1} parent=27 // pred_check_branch
          %441 = sbr.rel (%p439) target = $region44
        $region43: #{tpu_custom_call.1} parent=27 // pred_region
          %443 = vsyncadd %s435, 0
          %s444 = sadd.s32 %s27, %s26
          %s445 = smul.addr %s444, 8
          %s446 = scalar_lea.hbm %s2, %s445
          %s448 = sshll.u32 %s438, 4
          %s449 = int_to_ptr.vmem [resolvable:$true] %s448
          %s450 = sshll.u32 %s446, 4
          %s451 = int_to_ptr.hbm [resolvable:$true] %s450
          %453 = dma.vmem_to_hbm [thread:$0]  %s449, 128, %s451, %s435
        $region44: #{tpu_custom_call.1} parent=27 // pred_fallthru
          _
      $region28: #{tpu_custom_call.1} parent=5 // pred_fallthru
        _
      %p454 = scmp.le.s32.totalorder 2, %s17
      // Predicated region
      $region45: #{tpu_custom_call.1} parent=5 // pred_check
        %p455 = pneg %p454
      $region46: #{tpu_custom_call.1} parent=5 // pred_check_branch
        %457 = sbr.rel (%p455) target = $region48
      $region47: #{tpu_custom_call.1} parent=5 // pred_region
        %s458 = ssub.s32 %s17, 2
        // Predicated region
        $region49: #{tpu_custom_call.1} parent=47 // pred_check
          %p459 = pneg %p116
        $region50: #{tpu_custom_call.1} parent=47 // pred_check_branch
          %461 = sbr.rel (%p459) target = $region52
        $region51: #{tpu_custom_call.1} parent=47 // pred_region
          %s462 = sand.u32 %s101, 1
          %s463 = scalar_lea.sflag [#allocation6], %s462
          %s464 = sand.u32 %s101, 1
          %s465 = smul.addr %s464, 8
          %s466 = scalar_lea.vmem [#allocation9], %s465
          %468 = dma.done %s463, 128
        $region52: #{tpu_custom_call.1} parent=47 // pred_fallthru
          _
      $region48: #{tpu_custom_call.1} parent=5 // pred_fallthru
        _
    $region6: #{tpu_custom_call.1} parent=1 // loop_footer
      %s21 = sadd.s32 1, %s17
    $region7: #{tpu_custom_call.1} parent=1 // loop_footer_branch
      %16 = sbr.rel target = $region3
    $region8: #{tpu_custom_call.1} parent=1 // loop_exit
      _
    %469 = vsyncpa [#allocation5], 1
    %s470 = scalar_lea.sflag [#allocation5], 1
    %471 = vsyncpa %s470, 1
    %472 = vsyncpa [#allocation8], 1
    %s473 = scalar_lea.sflag [#allocation8], 1
    %474 = vsyncpa %s473, 1
    %475 = vsyncpa [#allocation6], 1
    %s476 = scalar_lea.sflag [#allocation6], 1
    %477 = vsyncpa %s476, 1

</llo_original>
